<compile_context>
chip_gen: v5e
topology: v5e:2x2
jax: 0.10.0
libtpu: 0.0.40
codegen_flags: <defaults>
</compile_context>

<pallas_src>
import jax
import jax.numpy as jnp
import numpy as np
from jax.experimental import pallas as pl
from jax.experimental.pallas import tpu as pltpu

EPS = 1e-5      # nn.InstanceNorm2d default (affine=False, biased variance)
SUBLANE = 8     # f32 sublane tile height


def _round_up(n, m):
    return (n + m - 1) // m * m


def _pack_conv_weights(w_oihw, cin_pad, cout_pad):
    """(Cout, Cin, 3, 3) OIHW -> (cout_pad, 9*cin_pad).

    Column index = tap*cin_pad + ci (tap = kh*3 + kw, row-major), matching the
    tap-major / channel-minor row order produced by the in-kernel im2col.
    Zero rows/cols pad the channel counts up to sublane multiples.
    """
    cout, cin = w_oihw.shape[0], w_oihw.shape[1]
    w_taps = jnp.transpose(w_oihw, (2, 3, 0, 1)).reshape(9, cout, cin)
    w_taps = jnp.pad(w_taps, ((0, 0), (0, cout_pad - cout), (0, cin_pad - cin)))
    return jnp.transpose(w_taps, (1, 0, 2)).reshape(cout_pad, 9 * cin_pad)


def _boundary_masks(H, W):
    """(8, H*W) f32: one row per non-centre tap; 1 inside the image, 0 where the
    flat lane roll would wrap across an image / row boundary (replaces padding)."""
    pos = np.arange(H * W)
    row, col = pos // W, pos % W
    rows = []
    for kh in range(3):
        for kw in range(3):
            if kh == 1 and kw == 1:
                continue
            hh, ww = row + (kh - 1), col + (kw - 1)
            rows.append((hh >= 0) & (hh < H) & (ww >= 0) & (ww < W))
    return jnp.asarray(np.stack(rows, 0).astype(np.float32))


def res_unit_pallas(x_nchw, w1_oihw, w2_oihw):
    B, C, H, W = x_nchw.shape
    Cr = w1_oihw.shape[0]
    HW = H * W
    C_pad = _round_up(C, SUBLANE)
    Cr_pad = _round_up(Cr, SUBLANE)

    # Lane-dense layout: H*W on the lane axis; channels zero-padded to a
    # sublane multiple so every im2col slab is a full (8,128) tile.
    x3 = jnp.pad(x_nchw.reshape(B, C, HW), ((0, 0), (0, C_pad - C), (0, 0)))
    masks = _boundary_masks(H, W)                       # (8, HW)
    w1p = _pack_conv_weights(w1_oihw, C_pad, Cr_pad)    # (Cr_pad, 9*C_pad)
    w2p = _pack_conv_weights(w2_oihw, Cr_pad, C_pad)    # (C_pad, 9*Cr_pad)

    def kernel(x_ref, mask_ref, w1_ref, w2_ref, out_ref):
        f32 = jnp.float32
        x = x_ref[...].astype(f32)    # (C_pad, HW) — one sample
        m = mask_ref[...]             # (8, HW) boundary masks

        def im2col(a):
            # a: (R, HW) -> (9*R, HW); rows tap-major, matching the packed-weight
            # columns. Shifts go to the XLU (pltpu.roll); precomputed masks zero
            # the wrapped / out-of-image lanes (replaces zero padding).
            slabs = []
            mi = 0
            for kh in range(3):
                for kw in range(3):
                    delta = (kh - 1) * W + (kw - 1)   # flat lane offset of tap
                    if delta == 0:
                        slabs.append(a)               # centre tap: identity
                    else:
                        s = pltpu.roll(a, (-delta) % HW, 1)
                        slabs.append(s * m[mi:mi + 1, :])
                        mi += 1
            return jnp.concatenate(slabs, axis=0)

        def inorm_relu(a):
            # Per-row (= per channel) InstanceNorm over the lane axis; single
            # fused pass with a clamp against negative cancellation.
            mean = jnp.mean(a, axis=1, keepdims=True)
            msq = jnp.mean(a * a, axis=1, keepdims=True)
            var = jnp.maximum(msq - mean * mean, 0.0)
            return jnp.maximum((a - mean) * jax.lax.rsqrt(var + EPS), 0.0)

        # conv1 + InstanceNorm + ReLU  (conv bias dropped: a per-channel
        # constant is exactly cancelled by the InstanceNorm mean subtraction).
        h1 = inorm_relu(jnp.dot(w1_ref[...], im2col(x),
                                preferred_element_type=f32))    # (Cr_pad, HW)
        # conv2 + InstanceNorm + ReLU
        h2 = inorm_relu(jnp.dot(w2_ref[...], im2col(h1),
                                preferred_element_type=f32))    # (C_pad, HW)
        # Residual add; (C_pad, HW) store is lane-dense (256 lanes), unmasked.
        out_ref[...] = (h2 + x).astype(out_ref.dtype)

    out3 = pl.pallas_call(
        kernel,
        out_shape=jax.ShapeDtypeStruct((B, C_pad, HW), x_nchw.dtype),
        grid_spec=pltpu.PrefetchScalarGridSpec(
            num_scalar_prefetch=0,
            grid=(B,),                                    # one sample per step
            in_specs=[
                pl.BlockSpec((None, C_pad, HW), lambda b: (b, 0, 0)),
                pl.BlockSpec((8, HW), lambda b: (0, 0)),
                pl.BlockSpec((Cr_pad, 9 * C_pad), lambda b: (0, 0)),
                pl.BlockSpec((C_pad, 9 * Cr_pad), lambda b: (0, 0)),
            ],
            out_specs=pl.BlockSpec((None, C_pad, HW), lambda b: (b, 0, 0)),
        ),
        compiler_params=pltpu.CompilerParams(
            dimension_semantics=("parallel",)),
        input_output_aliases={0: 0},   # reuse the padded-input HBM buffer
    )(x3, masks, w1p, w2p)

    return out3[:, :C, :].reshape(B, C, H, W)


def res_unit_ref(x_nchw, w1, b1, w2, b2):
    """Plain-JAX reference (NCHW, OIHW, with conv biases) matching PyTorch."""
    def conv(x, w, b):
        y = jax.lax.conv_general_dilated(
            x, w, window_strides=(1, 1), padding=((1, 1), (1, 1)),
            dimension_numbers=("NCHW", "OIHW", "NCHW"))
        return y + b.reshape(1, -1, 1, 1)

    def inorm(x):
        mu = jnp.mean(x, axis=(2, 3), keepdims=True)
        var = jnp.mean((x - mu) ** 2, axis=(2, 3), keepdims=True)
        return (x - mu) * jax.lax.rsqrt(var + EPS)

    h = jnp.maximum(inorm(conv(x_nchw, w1, b1)), 0.0)
    h = jnp.maximum(inorm(conv(h, w2, b2)), 0.0)
    return h + x_nchw


if __name__ == "__main__":
    # Module config: Res_unit(in_c=4) -> reduce_c = 2
    B, C, H, W = 2, 4, 16, 16
    Cr = C // 2

    key = jax.random.PRNGKey(0)
    kx, k1, k2, k3, k4 = jax.random.split(key, 5)

    x = jax.random.normal(kx, (B, C, H, W), dtype=jnp.float32)
    # PyTorch-layout parameters (OIHW weights, per-channel biases).
    w1 = 0.2 * jax.random.normal(k1, (Cr, C, 3, 3), dtype=jnp.float32)
    b1 = 0.1 * jax.random.normal(k2, (Cr,), dtype=jnp.float32)
    w2 = 0.2 * jax.random.normal(k3, (C, Cr, 3, 3), dtype=jnp.float32)
    b2 = 0.1 * jax.random.normal(k4, (C,), dtype=jnp.float32)

    # Kernel omits the conv biases (exactly cancelled by InstanceNorm); the
    # reference keeps them, proving the semantics match the PyTorch module.
    run = jax.jit(res_unit_pallas)
    out = jax.block_until_ready(run(x, w1, w2))
    ref = jax.block_until_ready(res_unit_ref(x, w1, b1, w2, b2))

    np.testing.assert_allclose(np.asarray(out), np.asarray(ref),
                               rtol=2e-3, atol=2e-3)
    assert out.shape == (B, C, H, W)
    print("KERNEL_OK")
</pallas_src>

<mosaic_0001>
module attributes {stable_mosaic.version = 11 : i64} {
  func.func @kernel(%arg0: i32, %arg1: memref<1x8x256xf32, #tpu.memory_space<vmem>>, %arg2: memref<8x256xf32, #tpu.memory_space<vmem>>, %arg3: memref<8x72xf32, #tpu.memory_space<vmem>>, %arg4: memref<8x72xf32, #tpu.memory_space<vmem>>, %arg5: memref<1x8x256xf32, #tpu.memory_space<vmem>>) attributes {dimension_semantics = [#tpu.dimension_semantics<parallel>], iteration_bounds = array<i64: 2>, scalar_prefetch = 0 : i64, scratch_operands = 0 : i64, tpu.core_type = #tpu.core_type<tc>, window_params = [{transform_indices = @transform_0, window_bounds = array<i64: 1, 8, 256>}, {pipeline_mode = #tpu.pipeline_mode<synchronous>, transform_indices = @transform_1, window_bounds = array<i64: 8, 256>}, {pipeline_mode = #tpu.pipeline_mode<synchronous>, transform_indices = @transform_2, window_bounds = array<i64: 8, 72>}, {pipeline_mode = #tpu.pipeline_mode<synchronous>, transform_indices = @transform_3, window_bounds = array<i64: 8, 72>}, {transform_indices = @transform_4, window_bounds = array<i64: 1, 8, 256>}]} {
    %c0 = arith.constant 0 : index
    %c0_0 = arith.constant 0 : index
    %c0_1 = arith.constant 0 : index
    %0 = vector.load %arg1[%c0, %c0_0, %c0_1] : memref<1x8x256xf32, #tpu.memory_space<vmem>>, vector<1x8x256xf32>
    %1 = vector.shape_cast %0 : vector<1x8x256xf32> to vector<8x256xf32>
    %c0_2 = arith.constant 0 : index
    %c0_3 = arith.constant 0 : index
    %2 = vector.load %arg2[%c0_2, %c0_3] : memref<8x256xf32, #tpu.memory_space<vmem>>, vector<8x256xf32>
    %c0_4 = arith.constant 0 : index
    %c0_5 = arith.constant 0 : index
    %3 = vector.load %arg3[%c0_4, %c0_5] : memref<8x72xf32, #tpu.memory_space<vmem>>, vector<8x72xf32>
    %c17_i32 = arith.constant 17 : i32
    %4 = tpu.dynamic_rotate %1 by %c17_i32 dim 1 : vector<8x256xf32>, i32 -> vector<8x256xf32>
    %5 = vector.extract_strided_slice %2 {offsets = [0, 0], sizes = [1, 256], strides = [1, 1]} : vector<8x256xf32> to vector<1x256xf32>
    %6 = vector.broadcast %5 : vector<1x256xf32> to vector<8x256xf32>
    %7 = arith.mulf %4, %6 : vector<8x256xf32>
    %c16_i32 = arith.constant 16 : i32
    %8 = tpu.dynamic_rotate %1 by %c16_i32 dim 1 : vector<8x256xf32>, i32 -> vector<8x256xf32>
    %9 = vector.extract_strided_slice %2 {offsets = [1, 0], sizes = [1, 256], strides = [1, 1]} : vector<8x256xf32> to vector<1x256xf32>
    %10 = vector.broadcast %9 : vector<1x256xf32> to vector<8x256xf32>
    %11 = arith.mulf %8, %10 : vector<8x256xf32>
    %c15_i32 = arith.constant 15 : i32
    %12 = tpu.dynamic_rotate %1 by %c15_i32 dim 1 : vector<8x256xf32>, i32 -> vector<8x256xf32>
    %13 = vector.extract_strided_slice %2 {offsets = [2, 0], sizes = [1, 256], strides = [1, 1]} : vector<8x256xf32> to vector<1x256xf32>
    %14 = vector.broadcast %13 : vector<1x256xf32> to vector<8x256xf32>
    %15 = arith.mulf %12, %14 : vector<8x256xf32>
    %c1_i32 = arith.constant 1 : i32
    %16 = tpu.dynamic_rotate %1 by %c1_i32 dim 1 : vector<8x256xf32>, i32 -> vector<8x256xf32>
    %17 = vector.extract_strided_slice %2 {offsets = [3, 0], sizes = [1, 256], strides = [1, 1]} : vector<8x256xf32> to vector<1x256xf32>
    %18 = vector.broadcast %17 : vector<1x256xf32> to vector<8x256xf32>
    %19 = arith.mulf %16, %18 : vector<8x256xf32>
    %c255_i32 = arith.constant 255 : i32
    %20 = tpu.dynamic_rotate %1 by %c255_i32 dim 1 : vector<8x256xf32>, i32 -> vector<8x256xf32>
    %21 = vector.extract_strided_slice %2 {offsets = [4, 0], sizes = [1, 256], strides = [1, 1]} : vector<8x256xf32> to vector<1x256xf32>
    %22 = vector.broadcast %21 : vector<1x256xf32> to vector<8x256xf32>
    %23 = arith.mulf %20, %22 : vector<8x256xf32>
    %c241_i32 = arith.constant 241 : i32
    %24 = tpu.dynamic_rotate %1 by %c241_i32 dim 1 : vector<8x256xf32>, i32 -> vector<8x256xf32>
    %25 = vector.extract_strided_slice %2 {offsets = [5, 0], sizes = [1, 256], strides = [1, 1]} : vector<8x256xf32> to vector<1x256xf32>
    %26 = vector.broadcast %25 : vector<1x256xf32> to vector<8x256xf32>
    %27 = arith.mulf %24, %26 : vector<8x256xf32>
    %c240_i32 = arith.constant 240 : i32
    %28 = tpu.dynamic_rotate %1 by %c240_i32 dim 1 : vector<8x256xf32>, i32 -> vector<8x256xf32>
    %29 = vector.extract_strided_slice %2 {offsets = [6, 0], sizes = [1, 256], strides = [1, 1]} : vector<8x256xf32> to vector<1x256xf32>
    %30 = vector.broadcast %29 : vector<1x256xf32> to vector<8x256xf32>
    %31 = arith.mulf %28, %30 : vector<8x256xf32>
    %c239_i32 = arith.constant 239 : i32
    %32 = tpu.dynamic_rotate %1 by %c239_i32 dim 1 : vector<8x256xf32>, i32 -> vector<8x256xf32>
    %33 = vector.extract_strided_slice %2 {offsets = [7, 0], sizes = [1, 256], strides = [1, 1]} : vector<8x256xf32> to vector<1x256xf32>
    %34 = vector.broadcast %33 : vector<1x256xf32> to vector<8x256xf32>
    %35 = arith.mulf %32, %34 : vector<8x256xf32>
    %36 = tpu.concatenate %7, %11, %15, %19, %1, %23, %27, %31, %35 in 0 : vector<8x256xf32>, vector<8x256xf32>, vector<8x256xf32>, vector<8x256xf32>, vector<8x256xf32>, vector<8x256xf32>, vector<8x256xf32>, vector<8x256xf32>, vector<8x256xf32> -> vector<72x256xf32>
    %cst = arith.constant dense<0.000000e+00> : vector<8x256xf32>
    %37 = tpu.matmul %3, %36, %cst {dimension_numbers = #tpu.dot_dimension_numbers<[1], [0], [0], [1], [0, 0, 1, 1], [], []>} : vector<8x72xf32>, vector<72x256xf32>, vector<8x256xf32> -> vector<8x256xf32>
    %cst_6 = arith.constant dense<0.000000e+00> : vector<8xf32>
    %38 = vector.multi_reduction <add>, %37, %cst_6 [1] : vector<8x256xf32> to vector<8xf32>
    %39 = vector.shape_cast %38 : vector<8xf32> to vector<8x1xf32>
    %cst_7 = arith.constant 2.560000e+02 : f32
    %40 = vector.broadcast %cst_7 : f32 to vector<8x1xf32>
    %41 = arith.divf %39, %40 : vector<8x1xf32>
    %42 = arith.mulf %37, %37 : vector<8x256xf32>
    %cst_8 = arith.constant dense<0.000000e+00> : vector<8xf32>
    %43 = vector.multi_reduction <add>, %42, %cst_8 [1] : vector<8x256xf32> to vector<8xf32>
    %44 = vector.shape_cast %43 : vector<8xf32> to vector<8x1xf32>
    %cst_9 = arith.constant 2.560000e+02 : f32
    %45 = vector.broadcast %cst_9 : f32 to vector<8x1xf32>
    %46 = arith.divf %44, %45 : vector<8x1xf32>
    %47 = arith.mulf %41, %41 : vector<8x1xf32>
    %48 = arith.subf %46, %47 : vector<8x1xf32>
    %cst_10 = arith.constant 0.000000e+00 : f32
    %49 = vector.broadcast %cst_10 : f32 to vector<8x1xf32>
    %50 = arith.maximumf %48, %49 : vector<8x1xf32>
    %51 = vector.broadcast %41 : vector<8x1xf32> to vector<8x256xf32>
    %52 = arith.subf %37, %51 : vector<8x256xf32>
    %cst_11 = arith.constant 9.99999974E-6 : f32
    %53 = vector.broadcast %cst_11 : f32 to vector<8x1xf32>
    %54 = arith.addf %50, %53 : vector<8x1xf32>
    %55 = math.rsqrt %54 : vector<8x1xf32>
    %56 = vector.broadcast %55 : vector<8x1xf32> to vector<8x256xf32>
    %57 = arith.mulf %52, %56 : vector<8x256xf32>
    %cst_12 = arith.constant 0.000000e+00 : f32
    %58 = vector.broadcast %cst_12 : f32 to vector<8x256xf32>
    %59 = arith.maximumf %57, %58 : vector<8x256xf32>
    %c0_13 = arith.constant 0 : index
    %c0_14 = arith.constant 0 : index
    %60 = vector.load %arg4[%c0_13, %c0_14] : memref<8x72xf32, #tpu.memory_space<vmem>>, vector<8x72xf32>
    %c17_i32_15 = arith.constant 17 : i32
    %61 = tpu.dynamic_rotate %59 by %c17_i32_15 dim 1 : vector<8x256xf32>, i32 -> vector<8x256xf32>
    %62 = vector.extract_strided_slice %2 {offsets = [0, 0], sizes = [1, 256], strides = [1, 1]} : vector<8x256xf32> to vector<1x256xf32>
    %63 = vector.broadcast %62 : vector<1x256xf32> to vector<8x256xf32>
    %64 = arith.mulf %61, %63 : vector<8x256xf32>
    %c16_i32_16 = arith.constant 16 : i32
    %65 = tpu.dynamic_rotate %59 by %c16_i32_16 dim 1 : vector<8x256xf32>, i32 -> vector<8x256xf32>
    %66 = vector.extract_strided_slice %2 {offsets = [1, 0], sizes = [1, 256], strides = [1, 1]} : vector<8x256xf32> to vector<1x256xf32>
    %67 = vector.broadcast %66 : vector<1x256xf32> to vector<8x256xf32>
    %68 = arith.mulf %65, %67 : vector<8x256xf32>
    %c15_i32_17 = arith.constant 15 : i32
    %69 = tpu.dynamic_rotate %59 by %c15_i32_17 dim 1 : vector<8x256xf32>, i32 -> vector<8x256xf32>
    %70 = vector.extract_strided_slice %2 {offsets = [2, 0], sizes = [1, 256], strides = [1, 1]} : vector<8x256xf32> to vector<1x256xf32>
    %71 = vector.broadcast %70 : vector<1x256xf32> to vector<8x256xf32>
    %72 = arith.mulf %69, %71 : vector<8x256xf32>
    %c1_i32_18 = arith.constant 1 : i32
    %73 = tpu.dynamic_rotate %59 by %c1_i32_18 dim 1 : vector<8x256xf32>, i32 -> vector<8x256xf32>
    %74 = vector.extract_strided_slice %2 {offsets = [3, 0], sizes = [1, 256], strides = [1, 1]} : vector<8x256xf32> to vector<1x256xf32>
    %75 = vector.broadcast %74 : vector<1x256xf32> to vector<8x256xf32>
    %76 = arith.mulf %73, %75 : vector<8x256xf32>
    %c255_i32_19 = arith.constant 255 : i32
    %77 = tpu.dynamic_rotate %59 by %c255_i32_19 dim 1 : vector<8x256xf32>, i32 -> vector<8x256xf32>
    %78 = vector.extract_strided_slice %2 {offsets = [4, 0], sizes = [1, 256], strides = [1, 1]} : vector<8x256xf32> to vector<1x256xf32>
    %79 = vector.broadcast %78 : vector<1x256xf32> to vector<8x256xf32>
    %80 = arith.mulf %77, %79 : vector<8x256xf32>
    %c241_i32_20 = arith.constant 241 : i32
    %81 = tpu.dynamic_rotate %59 by %c241_i32_20 dim 1 : vector<8x256xf32>, i32 -> vector<8x256xf32>
    %82 = vector.extract_strided_slice %2 {offsets = [5, 0], sizes = [1, 256], strides = [1, 1]} : vector<8x256xf32> to vector<1x256xf32>
    %83 = vector.broadcast %82 : vector<1x256xf32> to vector<8x256xf32>
    %84 = arith.mulf %81, %83 : vector<8x256xf32>
    %c240_i32_21 = arith.constant 240 : i32
    %85 = tpu.dynamic_rotate %59 by %c240_i32_21 dim 1 : vector<8x256xf32>, i32 -> vector<8x256xf32>
    %86 = vector.extract_strided_slice %2 {offsets = [6, 0], sizes = [1, 256], strides = [1, 1]} : vector<8x256xf32> to vector<1x256xf32>
    %87 = vector.broadcast %86 : vector<1x256xf32> to vector<8x256xf32>
    %88 = arith.mulf %85, %87 : vector<8x256xf32>
    %c239_i32_22 = arith.constant 239 : i32
    %89 = tpu.dynamic_rotate %59 by %c239_i32_22 dim 1 : vector<8x256xf32>, i32 -> vector<8x256xf32>
    %90 = vector.extract_strided_slice %2 {offsets = [7, 0], sizes = [1, 256], strides = [1, 1]} : vector<8x256xf32> to vector<1x256xf32>
    %91 = vector.broadcast %90 : vector<1x256xf32> to vector<8x256xf32>
    %92 = arith.mulf %89, %91 : vector<8x256xf32>
    %93 = tpu.concatenate %64, %68, %72, %76, %59, %80, %84, %88, %92 in 0 : vector<8x256xf32>, vector<8x256xf32>, vector<8x256xf32>, vector<8x256xf32>, vector<8x256xf32>, vector<8x256xf32>, vector<8x256xf32>, vector<8x256xf32>, vector<8x256xf32> -> vector<72x256xf32>
    %cst_23 = arith.constant dense<0.000000e+00> : vector<8x256xf32>
    %94 = tpu.matmul %60, %93, %cst_23 {dimension_numbers = #tpu.dot_dimension_numbers<[1], [0], [0], [1], [0, 0, 1, 1], [], []>} : vector<8x72xf32>, vector<72x256xf32>, vector<8x256xf32> -> vector<8x256xf32>
    %cst_24 = arith.constant dense<0.000000e+00> : vector<8xf32>
    %95 = vector.multi_reduction <add>, %94, %cst_24 [1] : vector<8x256xf32> to vector<8xf32>
    %96 = vector.shape_cast %95 : vector<8xf32> to vector<8x1xf32>
    %cst_25 = arith.constant 2.560000e+02 : f32
    %97 = vector.broadcast %cst_25 : f32 to vector<8x1xf32>
    %98 = arith.divf %96, %97 : vector<8x1xf32>
    %99 = arith.mulf %94, %94 : vector<8x256xf32>
    %cst_26 = arith.constant dense<0.000000e+00> : vector<8xf32>
    %100 = vector.multi_reduction <add>, %99, %cst_26 [1] : vector<8x256xf32> to vector<8xf32>
    %101 = vector.shape_cast %100 : vector<8xf32> to vector<8x1xf32>
    %cst_27 = arith.constant 2.560000e+02 : f32
    %102 = vector.broadcast %cst_27 : f32 to vector<8x1xf32>
    %103 = arith.divf %101, %102 : vector<8x1xf32>
    %104 = arith.mulf %98, %98 : vector<8x1xf32>
    %105 = arith.subf %103, %104 : vector<8x1xf32>
    %cst_28 = arith.constant 0.000000e+00 : f32
    %106 = vector.broadcast %cst_28 : f32 to vector<8x1xf32>
    %107 = arith.maximumf %105, %106 : vector<8x1xf32>
    %108 = vector.broadcast %98 : vector<8x1xf32> to vector<8x256xf32>
    %109 = arith.subf %94, %108 : vector<8x256xf32>
    %cst_29 = arith.constant 9.99999974E-6 : f32
    %110 = vector.broadcast %cst_29 : f32 to vector<8x1xf32>
    %111 = arith.addf %107, %110 : vector<8x1xf32>
    %112 = math.rsqrt %111 : vector<8x1xf32>
    %113 = vector.broadcast %112 : vector<8x1xf32> to vector<8x256xf32>
    %114 = arith.mulf %109, %113 : vector<8x256xf32>
    %cst_30 = arith.constant 0.000000e+00 : f32
    %115 = vector.broadcast %cst_30 : f32 to vector<8x256xf32>
    %116 = arith.maximumf %114, %115 : vector<8x256xf32>
    %117 = arith.addf %116, %1 : vector<8x256xf32>
    %c0_31 = arith.constant 0 : index
    %c0_32 = arith.constant 0 : index
    %c0_33 = arith.constant 0 : index
    %118 = vector.load %arg5[%c0_31, %c0_32, %c0_33] : memref<1x8x256xf32, #tpu.memory_space<vmem>>, vector<1x8x256xf32>
    %119 = vector.shape_cast %118 : vector<1x8x256xf32> to vector<8x256xf32>
    %120 = vector.shape_cast %117 : vector<8x256xf32> to vector<1x8x256xf32>
    tpu.vector_store %arg5[%c0_31, %c0_32, %c0_33], %120 {strides = array<i32>} : memref<1x8x256xf32, #tpu.memory_space<vmem>>, vector<1x8x256xf32>,
    return
  }
  func.func @transform_0(%arg0: i32) -> (i32, i32, i32) {
    %c0_i32 = arith.constant 0 : i32
    %c0_i32_0 = arith.constant 0 : i32
    %c0_i32_1 = arith.constant 0 : i32
    return %arg0, %c0_i32, %c0_i32_0 : i32, i32, i32
  }
  func.func @transform_1(%arg0: i32) -> (i32, i32) {
    %c0_i32 = arith.constant 0 : i32
    %c0_i32_0 = arith.constant 0 : i32
    %c0_i32_1 = arith.constant 0 : i32
    return %c0_i32, %c0_i32_0 : i32, i32
  }
  func.func @transform_2(%arg0: i32) -> (i32, i32) {
    %c0_i32 = arith.constant 0 : i32
    %c0_i32_0 = arith.constant 0 : i32
    %c0_i32_1 = arith.constant 0 : i32
    return %c0_i32, %c0_i32_0 : i32, i32
  }
  func.func @transform_3(%arg0: i32) -> (i32, i32) {
    %c0_i32 = arith.constant 0 : i32
    %c0_i32_0 = arith.constant 0 : i32
    %c0_i32_1 = arith.constant 0 : i32
    return %c0_i32, %c0_i32_0 : i32, i32
  }
  func.func @transform_4(%arg0: i32) -> (i32, i32, i32) {
    %c0_i32 = arith.constant 0 : i32
    %c0_i32_0 = arith.constant 0 : i32
    %c0_i32_1 = arith.constant 0 : i32
    return %arg0, %c0_i32, %c0_i32_0 : i32, i32, i32
  }
}

</mosaic_0001>

<llo_original>
// kernel: res_unit_pallas.1
$region0: #{res_unit_pallas.1}
  #allocation0 [shape = 'u32[]', space=smem, size = 0x4, offset = 0x4, fixed_abs, tag = 'smem constant byte address 0x4 - core index']
  #allocation1 [shape = 'u32[72,128]{1,0:T(1,128)}', space=vmem, size = 0x9000, scoped, tag = 'internal scratch']
  %s0 = inlined_call_operand.vmem [shape: f32[2,8,256], index: 0, kind: input, shape index: {}, may-alias: {0,4}]
  %s1 = inlined_call_operand.vmem [shape: f32[8,256], index: 1, kind: input, shape index: {}]
  %s2 = inlined_call_operand.vmem [shape: f32[8,72], index: 2, kind: input, shape index: {}]
  %s3 = inlined_call_operand.vmem [shape: f32[8,72], index: 3, kind: input, shape index: {}]
  %s4 = inlined_call_operand.vmem [shape: f32[2,8,256], index: 4, kind: output, shape index: {}, may-alias: {0,4}]
  %s5 = sld [smem:[#allocation0]]
  $region49: #{res_unit_pallas.1} parent=0
    _
  %s7 = ssub.s32 1, %s5
  %s8 = scalar_select 0, %s7, %s5
  loop: start=0, step=1, limit=4
  $region2: #{res_unit_pallas.1} parent=0 // loop_pre_header
    _
  $region3: #{res_unit_pallas.1} parent=0 // loop_header
    %s10 = sphi 0, %s14
    %p11 = scmp.ge.s32.totalorder %s10, 4
    %s20 = sphi 0, %s22
    %s23 = sphi 0, %s20
    %s24 = sphi 0, %s23
    %s40 = sphi 0, %s24
    %s44 = sphi 0, %s44
    %s46 = sphi 0, %s44
    %s47 = sphi 0, %s46
    %s61 = sphi 0, %s47
    %s65 = sphi 0, %s65
    %s67 = sphi 0, %s65
    %s68 = sphi 0, %s67
    %s82 = sphi 0, %s68
    %s86 = sphi 0, %s86
    %s88 = sphi 0, %s86
    %s89 = sphi 0, %s88
    %s103 = sphi 0, %s89
    %s109 = sphi 0, %s111
    %s112 = sphi 0, %s109
    %s113 = sphi 0, %s112
    %s129 = sphi 0, %s113
  $region4: #{res_unit_pallas.1} parent=0 // loop_header_branch
    %13 = sbr.rel (%p11) target = $region8
  $region5: #{res_unit_pallas.1} parent=0 // loop_body
    %s15 = ssub.s32 %s10, 1
    %s16 = ssub.s32 %s10, 2
    %s17 = sadd.s32 %s10, 1
    %s18 = ssub.s32 %s10, %s17
    %p19 = scmp.eq.s32.totalorder %s18, 0
    %s21 = sadd.s32 %s20, 1
    %s22 = scalar_select %p19, %s20, %s21
    %p25 = pneg %p19
    %p26 = scmp.eq.s32.totalorder %s10, 1
    %p27 = por %p25, %p26
    %p28 = scmp.ne.s32.totalorder %s20, %s23
    %p29 = scmp.eq.s32.totalorder %s10, 0
    %p30 = por %p28, %p29
    %p31 = scmp.ne.s32.totalorder %s20, %s23
    %p32 = scmp.eq.s32.totalorder %s15, 1
    %p33 = por %p31, %p32
    %p34 = scmp.ne.s32.totalorder %s23, %s24
    %p35 = scmp.eq.s32.totalorder %s15, 0
    %p36 = por %p34, %p35
    %p37 = scmp.ne.s32.totalorder %s23, %s24
    %p38 = scmp.eq.s32.totalorder %s16, 1
    %p39 = por %p37, %p38
    %p41 = scmp.ne.s32.totalorder %s24, %s40
    %p42 = scmp.eq.s32.totalorder %s16, 0
    %p43 = por %p41, %p42
    %s45 = sadd.s32 %s44, 1
    %p48 = scmp.eq.s32.totalorder %s10, 1
    %p49 = scmp.ne.s32.totalorder %s44, %s46
    %p50 = scmp.eq.s32.totalorder %s10, 0
    %p51 = por %p49, %p50
    %p52 = scmp.ne.s32.totalorder %s44, %s46
    %p53 = scmp.eq.s32.totalorder %s15, 1
    %p54 = por %p52, %p53
    %p55 = scmp.ne.s32.totalorder %s46, %s47
    %p56 = scmp.eq.s32.totalorder %s15, 0
    %p57 = por %p55, %p56
    %p58 = scmp.ne.s32.totalorder %s46, %s47
    %p59 = scmp.eq.s32.totalorder %s16, 1
    %p60 = por %p58, %p59
    %p62 = scmp.ne.s32.totalorder %s47, %s61
    %p63 = scmp.eq.s32.totalorder %s16, 0
    %p64 = por %p62, %p63
    %s66 = sadd.s32 %s65, 1
    %p69 = scmp.eq.s32.totalorder %s10, 1
    %p70 = scmp.ne.s32.totalorder %s65, %s67
    %p71 = scmp.eq.s32.totalorder %s10, 0
    %p72 = por %p70, %p71
    %p73 = scmp.ne.s32.totalorder %s65, %s67
    %p74 = scmp.eq.s32.totalorder %s15, 1
    %p75 = por %p73, %p74
    %p76 = scmp.ne.s32.totalorder %s67, %s68
    %p77 = scmp.eq.s32.totalorder %s15, 0
    %p78 = por %p76, %p77
    %p79 = scmp.ne.s32.totalorder %s67, %s68
    %p80 = scmp.eq.s32.totalorder %s16, 1
    %p81 = por %p79, %p80
    %p83 = scmp.ne.s32.totalorder %s68, %s82
    %p84 = scmp.eq.s32.totalorder %s16, 0
    %p85 = por %p83, %p84
    %s87 = sadd.s32 %s86, 1
    %p90 = scmp.eq.s32.totalorder %s10, 1
    %p91 = scmp.ne.s32.totalorder %s86, %s88
    %p92 = scmp.eq.s32.totalorder %s10, 0
    %p93 = por %p91, %p92
    %p94 = scmp.ne.s32.totalorder %s86, %s88
    %p95 = scmp.eq.s32.totalorder %s15, 1
    %p96 = por %p94, %p95
    %p97 = scmp.ne.s32.totalorder %s88, %s89
    %p98 = scmp.eq.s32.totalorder %s15, 0
    %p99 = por %p97, %p98
    %p100 = scmp.ne.s32.totalorder %s88, %s89
    %p101 = scmp.eq.s32.totalorder %s16, 1
    %p102 = por %p100, %p101
    %p104 = scmp.ne.s32.totalorder %s89, %s103
    %p105 = scmp.eq.s32.totalorder %s16, 0
    %p106 = por %p104, %p105
    %s107 = ssub.s32 %s10, %s17
    %p108 = scmp.eq.s32.totalorder %s107, 0
    %s110 = sadd.s32 %s109, 1
    %s111 = scalar_select %p108, %s109, %s110
    %p114 = pneg %p108
    %p115 = scmp.eq.s32.totalorder %s10, 1
    %p116 = por %p114, %p115
    %p117 = scmp.ne.s32.totalorder %s109, %s112
    %p118 = scmp.eq.s32.totalorder %s10, 0
    %p119 = por %p117, %p118
    %p120 = scmp.ne.s32.totalorder %s109, %s112
    %p121 = scmp.eq.s32.totalorder %s15, 1
    %p122 = por %p120, %p121
    %p123 = scmp.ne.s32.totalorder %s112, %s113
    %p124 = scmp.eq.s32.totalorder %s15, 0
    %p125 = por %p123, %p124
    %p126 = scmp.ne.s32.totalorder %s112, %s113
    %p127 = scmp.eq.s32.totalorder %s16, 1
    %p128 = por %p126, %p127
    %p130 = scmp.ne.s32.totalorder %s113, %s129
    %p131 = scmp.eq.s32.totalorder %s16, 0
    %p132 = por %p130, %p131
    %p133 = scmp.le.s32.totalorder 1, %s10
    %p134 = scmp.lt.s32.totalorder %s10, 3
    %p135 = pnand %p133, %p134
    %p136 = pneg %p135
    // Predicated region
    $region9: #{res_unit_pallas.1} parent=5 // pred_check
      _
    $region10: #{res_unit_pallas.1} parent=5 // pred_check_branch
      %138 = sbr.rel (%p135) target = $region12
    $region11: #{res_unit_pallas.1} parent=5 // pred_region
      %s139 = ssub.s32 %s10, 1
      // Predicated region
      $region13: #{res_unit_pallas.1} parent=11 // pred_check
        %p140 = pneg %p57
      $region14: #{res_unit_pallas.1} parent=11 // pred_check_branch
        %142 = sbr.rel (%p140) target = $region16
      $region15: #{res_unit_pallas.1} parent=11 // pred_region
        _
      $region16: #{res_unit_pallas.1} parent=11 // pred_fallthru
        _
      // Predicated region
      $region17: #{res_unit_pallas.1} parent=11 // pred_check
        %p143 = pneg %p78
      $region18: #{res_unit_pallas.1} parent=11 // pred_check_branch
        %145 = sbr.rel (%p143) target = $region20
      $region19: #{res_unit_pallas.1} parent=11 // pred_region
        _
      $region20: #{res_unit_pallas.1} parent=11 // pred_fallthru
        _
      // Predicated region
      $region21: #{res_unit_pallas.1} parent=11 // pred_check
        %p146 = pneg %p99
      $region22: #{res_unit_pallas.1} parent=11 // pred_check_branch
        %148 = sbr.rel (%p146) target = $region24
      $region23: #{res_unit_pallas.1} parent=11 // pred_region
        _
      $region24: #{res_unit_pallas.1} parent=11 // pred_fallthru
        _
    $region12: #{res_unit_pallas.1} parent=5 // pred_fallthru
      _
    %p149 = scmp.lt.s32.totalorder %s10, 2
    // Predicated region
    $region25: #{res_unit_pallas.1} parent=5 // pred_check
      %p150 = pneg %p149
    $region26: #{res_unit_pallas.1} parent=5 // pred_check_branch
      %152 = sbr.rel (%p150) target = $region28
    $region27: #{res_unit_pallas.1} parent=5 // pred_region
      // Predicated region
      $region29: #{res_unit_pallas.1} parent=27 // pred_check
        %p153 = pneg %p30
      $region30: #{res_unit_pallas.1} parent=27 // pred_check_branch
        %155 = sbr.rel (%p153) target = $region32
      $region31: #{res_unit_pallas.1} parent=27 // pred_region
        %p156 = scmp.lt.s32.totalorder %s10, 1
        %s157 = scalar_select %p156, %s10, 1
        %s158 = smul.addr %s157, 2
        %s159 = smul.addr %s158, 8
        %s160 = scalar_lea.vmem %s0, %s159
      $region32: #{res_unit_pallas.1} parent=27 // pred_fallthru
        _
    $region28: #{res_unit_pallas.1} parent=5 // pred_fallthru
      _
    %p161 = scmp.le.s32.totalorder 1, %s10
    %p162 = scmp.lt.s32.totalorder %s10, 3
    %p163 = pnand %p161, %p162
    %p164 = pneg %p163
    // Predicated region
    $region33: #{res_unit_pallas.1} parent=5 // pred_check
      _
    $region34: #{res_unit_pallas.1} parent=5 // pred_check_branch
      %166 = sbr.rel (%p163) target = $region36
    $region35: #{res_unit_pallas.1} parent=5 // pred_region
      %s167 = ssub.s32 %s10, 1
      %p168 = scmp.lt.s32.totalorder %s15, 1
      %s169 = scalar_select %p168, %s15, 1
      %s170 = smul.addr %s169, 2
      %s171 = smul.addr %s170, 8
      %s172 = scalar_lea.vmem %s0, %s171
      %p173 = pneg %p36
      %p174 = pneg %p33
      %p175 = pneg %p57
      %p176 = pneg %p54
      %p177 = pneg %p78
      %p178 = pneg %p75
      %p179 = pneg %p99
      %p180 = pneg %p96
      %p181 = pneg %p125
      %p182 = pneg %p122
      %p183 = scmp.lt.s32.totalorder %s15, 1
      %s184 = scalar_select %p183, %s15, 1
      %s185 = smul.addr %s184, 2
      %s186 = smul.addr %s185, 8
      %s187 = scalar_lea.vmem %s4, %s186
      %p188 = scmp.lt.s32.totalorder %s15, 1
      %s189 = scalar_select %p188, %s15, 1
      %s190 = smul.addr %s189, 2
      %s191 = smul.addr %s190, 8
      %s192 = scalar_lea.vmem %s0, %s191
      %p193 = scmp.lt.s32.totalorder %s15, 1
      %s194 = scalar_select %p193, %s15, 1
      %s195 = smul.addr %s194, 2
      %s196 = smul.addr %s195, 8
      %s197 = scalar_lea.vmem %s4, %s196
      %v198 = vld [vmem:[%s192] sm:$0xff]
      %v199 = vld [vmem:[%s192 + $0x8] sm:$0xff]
      %v200 = vld [vmem:[%s1] sm:$0xff]
      %v201 = vld [vmem:[%s1 + $0x8] sm:$0xff]
      %v202 = vld [vmem:[%s2] sm:$0xff]
      %203 = vrot.lane.b32.xlu0 %v198, 17
      %v204 = vpop.permute.xlu0 %203
      %205 = vrot.lane.b32.xlu0 %v199, 17
      %v206 = vpop.permute.xlu0 %205
      %v207 = vlaneseq
      %v208 = vand.u32 %v207, 127
      %vm209 = vcmp.lt.s32.totalorder %v208, 17
      %v210 = vsel %vm209, %v204, %v206
      %v211 = vsel %vm209, %v206, %v204
      %v212 = vperm.slane %v200, 0
      %v213 = vperm.slane %v201, 0
      %v214 = vmul.f32 %v211, %v212
      %v215 = vmul.f32 %v210, %v213
      %216 = vrot.lane.b32.xlu0 %v198, 16
      %v217 = vpop.permute.xlu0 %216
      %218 = vrot.lane.b32.xlu0 %v199, 16
      %v219 = vpop.permute.xlu0 %218
      %vm220 = vcmp.lt.s32.totalorder %v208, 16
      %v221 = vsel %vm220, %v217, %v219
      %v222 = vsel %vm220, %v219, %v217
      %v223 = vperm.slane %v200, 1
      %v224 = vperm.slane %v201, 1
      %v225 = vmul.f32 %v222, %v223
      %v226 = vmul.f32 %v221, %v224
      %227 = vrot.lane.b32.xlu0 %v198, 15
      %v228 = vpop.permute.xlu0 %227
      %229 = vrot.lane.b32.xlu0 %v199, 15
      %v230 = vpop.permute.xlu0 %229
      %vm231 = vcmp.lt.s32.totalorder %v208, 15
      %v232 = vsel %vm231, %v228, %v230
      %v233 = vsel %vm231, %v230, %v228
      %v234 = vperm.slane %v200, 2
      %v235 = vperm.slane %v201, 2
      %v236 = vmul.f32 %v233, %v234
      %v237 = vmul.f32 %v232, %v235
      %238 = vrot.lane.b32.xlu0 %v198, 1
      %v239 = vpop.permute.xlu0 %238
      %240 = vrot.lane.b32.xlu0 %v199, 1
      %v241 = vpop.permute.xlu0 %240
      %vm242 = vcmp.lt.s32.totalorder %v208, 1
      %v243 = vsel %vm242, %v239, %v241
      %v244 = vsel %vm242, %v241, %v239
      %v245 = vperm.slane %v200, 3
      %v246 = vperm.slane %v201, 3
      %v247 = vmul.f32 %v244, %v245
      %v248 = vmul.f32 %v243, %v246
      %249 = vrot.lane.b32.xlu0 %v198, 127
      %v250 = vpop.permute.xlu0 %249
      %251 = vrot.lane.b32.xlu0 %v199, 127
      %v252 = vpop.permute.xlu0 %251
      %vm253 = vcmp.lt.s32.totalorder %v208, 127
      %v254 = vsel %vm253, %v250, %v252
      %v255 = vsel %vm253, %v252, %v250
      %v256 = vperm.slane %v200, 4
      %v257 = vperm.slane %v201, 4
      %v258 = vmul.f32 %v254, %v256
      %v259 = vmul.f32 %v255, %v257
      %260 = vrot.lane.b32.xlu0 %v198, 113
      %v261 = vpop.permute.xlu0 %260
      %262 = vrot.lane.b32.xlu0 %v199, 113
      %v263 = vpop.permute.xlu0 %262
      %vm264 = vcmp.lt.s32.totalorder %v208, 113
      %v265 = vsel %vm264, %v261, %v263
      %v266 = vsel %vm264, %v263, %v261
      %v267 = vperm.slane %v200, 5
      %v268 = vperm.slane %v201, 5
      %v269 = vmul.f32 %v265, %v267
      %v270 = vmul.f32 %v266, %v268
      %271 = vrot.lane.b32.xlu0 %v198, 112
      %v272 = vpop.permute.xlu0 %271
      %273 = vrot.lane.b32.xlu0 %v199, 112
      %v274 = vpop.permute.xlu0 %273
      %vm275 = vcmp.lt.s32.totalorder %v208, 112
      %v276 = vsel %vm275, %v272, %v274
      %v277 = vsel %vm275, %v274, %v272
      %v278 = vperm.slane %v200, 6
      %v279 = vperm.slane %v201, 6
      %v280 = vmul.f32 %v276, %v278
      %v281 = vmul.f32 %v277, %v279
      %282 = vrot.lane.b32.xlu0 %v198, 111
      %v283 = vpop.permute.xlu0 %282
      %284 = vrot.lane.b32.xlu0 %v199, 111
      %v285 = vpop.permute.xlu0 %284
      %vm286 = vcmp.lt.s32.totalorder %v208, 111
      %v287 = vsel %vm286, %v283, %v285
      %v288 = vsel %vm286, %v285, %v283
      %v289 = vperm.slane %v200, 7
      %v290 = vperm.slane %v201, 7
      %v291 = vmul.f32 %v287, %v289
      %v292 = vmul.f32 %v288, %v290
      %vm293 = vcmask 588800
      %v295 = vsel %vm293, %v202, 0
      %297 = vmatpush.msra.mxu0 0.0
      %298 = vmatpush.msra.mxu0 0.0
      %299 = vmatpush.msra.mxu0 0.0
      %300 = vmatpush.msra.mxu0 0.0
      %301 = vmatpush.msra.mxu0 0.0
      %302 = vmatpush.msra.mxu0 0.0
      %303 = vmatpush.msra.mxu0 0.0
      %304 = vmatpush.msra.mxu0 %v291
      %305 = vmatpush.msra.mxu0 %v280
      %306 = vmatpush.msra.mxu0 %v269
      %307 = vmatpush.msra.mxu0 %v258
      %308 = vmatpush.msra.mxu0 %v198
      %309 = vmatpush.msra.mxu0 %v247
      %310 = vmatpush.msra.mxu0 %v236
      %311 = vmatpush.msra.mxu0 %v225
      %312 = vmatpush.msra.mxu0 %v214
      %313 = vmatmul.f32.gmra.mxu0 %v295
      %v314 = vpop.f32.mrf.mxu0
      %v315 = vadd.f32 0.0, %v314
      %316 = vdwg.mxu0
      %317 = vmatpush.msra.mxu0 0.0
      %318 = vmatpush.msra.mxu0 0.0
      %319 = vmatpush.msra.mxu0 0.0
      %320 = vmatpush.msra.mxu0 0.0
      %321 = vmatpush.msra.mxu0 0.0
      %322 = vmatpush.msra.mxu0 0.0
      %323 = vmatpush.msra.mxu0 0.0
      %324 = vmatpush.msra.mxu0 %v292
      %325 = vmatpush.msra.mxu0 %v281
      %326 = vmatpush.msra.mxu0 %v270
      %327 = vmatpush.msra.mxu0 %v259
      %328 = vmatpush.msra.mxu0 %v199
      %329 = vmatpush.msra.mxu0 %v248
      %330 = vmatpush.msra.mxu0 %v237
      %331 = vmatpush.msra.mxu0 %v226
      %332 = vmatpush.msra.mxu0 %v215
      %333 = vmatmul.f32.gmra.mxu0 %v295
      %v334 = vpop.f32.mrf.mxu0
      %v335 = vadd.f32 0.0, %v334
      %336 = vdwg.mxu0
      %v337 = vadd.f32 %v315, %v335
      %338 = vadd.xlane.f32.xlu0 %v337
      %v339 = vpop.xlane.xlu0 %338
      %v340 = vrcp.pop 256.0
      %v341 = vmul.f32 256.0, %v340
      %v342 = vsub.f32 1.0, %v341
      %v343 = vmul.f32 %v340, %v342
      %v344 = vadd.f32 %v340, %v343
      %vm345 = vweird.f32 %v340
      %v346 = vsel %vm345, %v340, %v344
      %v347 = vmul.f32 %v339, %v346
      %v348 = vmul.f32 %v315, %v315
      %v349 = vmul.f32 %v335, %v335
      %v350 = vadd.f32 %v348, %v349
      %351 = vadd.xlane.f32.xlu0 %v350
      %v352 = vpop.xlane.xlu0 %351
      %v353 = vmul.f32 %v352, %v346
      %v354 = vmul.f32 %v347, %v347
      %v355 = vsub.f32 %v353, %v354
      %v356 = vmax.f32 %v355, 0.0
      %v357 = vsub.f32 %v315, %v347
      %v358 = vsub.f32 %v335, %v347
      %v359 = vadd.f32 %v356, 1e-05
      %v360 = vrsqrt.pop %v359
      %v361 = vmul.f32 %v360, %v359
      %v362 = vmul.f32 %v361, %v360
      %v363 = vmul.f32 0.5, %v362
      %v364 = vsub.f32 1.5, %v363
      %v365 = vmul.f32 %v360, %v364
      %vm366 = vweird.f32 %v359
      %vm367 = vweird.f32 %v360
      %vm368 = vmor %vm366, %vm367
      %v369 = vsel %vm368, %v360, %v365
      %v370 = vmul.f32 %v357, %v369
      %v371 = vmul.f32 %v358, %v369
      %v372 = vmax.f32 %v370, 0.0
      %v373 = vmax.f32 %v371, 0.0
      %v374 = vld [vmem:[%s3] sm:$0xff]
      %375 = vrot.lane.b32.xlu0 %v372, 17
      %v376 = vpop.permute.xlu0 %375
      %377 = vrot.lane.b32.xlu0 %v373, 17
      %v378 = vpop.permute.xlu0 %377
      %v379 = vsel %vm209, %v376, %v378
      %v380 = vsel %vm209, %v378, %v376
      %v381 = vmul.f32 %v380, %v212
      %v382 = vmul.f32 %v379, %v213
      %383 = vrot.lane.b32.xlu0 %v372, 16
      %v384 = vpop.permute.xlu0 %383
      %385 = vrot.lane.b32.xlu0 %v373, 16
      %v386 = vpop.permute.xlu0 %385
      %v387 = vsel %vm220, %v384, %v386
      %v388 = vsel %vm220, %v386, %v384
      %v389 = vmul.f32 %v388, %v223
      %v390 = vmul.f32 %v387, %v224
      %391 = vrot.lane.b32.xlu0 %v372, 15
      %v392 = vpop.permute.xlu0 %391
      %393 = vrot.lane.b32.xlu0 %v373, 15
      %v394 = vpop.permute.xlu0 %393
      %v395 = vsel %vm231, %v392, %v394
      %v396 = vsel %vm231, %v394, %v392
      %v397 = vmul.f32 %v396, %v234
      %v398 = vmul.f32 %v395, %v235
      %399 = vrot.lane.b32.xlu0 %v372, 1
      %v400 = vpop.permute.xlu0 %399
      %401 = vrot.lane.b32.xlu0 %v373, 1
      %v402 = vpop.permute.xlu0 %401
      %v403 = vsel %vm242, %v400, %v402
      %v404 = vsel %vm242, %v402, %v400
      %v405 = vmul.f32 %v404, %v245
      %v406 = vmul.f32 %v403, %v246
      %407 = vrot.lane.b32.xlu0 %v372, 127
      %v408 = vpop.permute.xlu0 %407
      %409 = vrot.lane.b32.xlu0 %v373, 127
      %v410 = vpop.permute.xlu0 %409
      %v411 = vsel %vm253, %v408, %v410
      %v412 = vsel %vm253, %v410, %v408
      %v413 = vmul.f32 %v411, %v256
      %v414 = vmul.f32 %v412, %v257
      %415 = vrot.lane.b32.xlu0 %v372, 113
      %v416 = vpop.permute.xlu0 %415
      %417 = vrot.lane.b32.xlu0 %v373, 113
      %v418 = vpop.permute.xlu0 %417
      %v419 = vsel %vm264, %v416, %v418
      %v420 = vsel %vm264, %v418, %v416
      %v421 = vmul.f32 %v419, %v267
      %v422 = vmul.f32 %v420, %v268
      %423 = vrot.lane.b32.xlu0 %v372, 112
      %v424 = vpop.permute.xlu0 %423
      %425 = vrot.lane.b32.xlu0 %v373, 112
      %v426 = vpop.permute.xlu0 %425
      %v427 = vsel %vm275, %v424, %v426
      %v428 = vsel %vm275, %v426, %v424
      %v429 = vmul.f32 %v427, %v278
      %v430 = vmul.f32 %v428, %v279
      %431 = vrot.lane.b32.xlu0 %v372, 111
      %v432 = vpop.permute.xlu0 %431
      %433 = vrot.lane.b32.xlu0 %v373, 111
      %v434 = vpop.permute.xlu0 %433
      %v435 = vsel %vm286, %v432, %v434
      %v436 = vsel %vm286, %v434, %v432
      %v437 = vmul.f32 %v435, %v289
      %v438 = vmul.f32 %v436, %v290
      %v440 = vsel %vm293, %v374, 0
      %442 = vmatpush.msra.mxu0 0.0
      %443 = vmatpush.msra.mxu0 0.0
      %444 = vmatpush.msra.mxu0 0.0
      %445 = vmatpush.msra.mxu0 0.0
      %446 = vmatpush.msra.mxu0 0.0
      %447 = vmatpush.msra.mxu0 0.0
      %448 = vmatpush.msra.mxu0 0.0
      %449 = vmatpush.msra.mxu0 %v437
      %450 = vmatpush.msra.mxu0 %v429
      %451 = vmatpush.msra.mxu0 %v421
      %452 = vmatpush.msra.mxu0 %v413
      %453 = vmatpush.msra.mxu0 %v372
      %454 = vmatpush.msra.mxu0 %v405
      %455 = vmatpush.msra.mxu0 %v397
      %456 = vmatpush.msra.mxu0 %v389
      %457 = vmatpush.msra.mxu0 %v381
      %458 = vmatmul.f32.gmra.mxu0 %v440
      %v459 = vpop.f32.mrf.mxu0
      %v460 = vadd.f32 0.0, %v459
      %461 = vdwg.mxu0
      %462 = vmatpush.msra.mxu0 0.0
      %463 = vmatpush.msra.mxu0 0.0
      %464 = vmatpush.msra.mxu0 0.0
      %465 = vmatpush.msra.mxu0 0.0
      %466 = vmatpush.msra.mxu0 0.0
      %467 = vmatpush.msra.mxu0 0.0
      %468 = vmatpush.msra.mxu0 0.0
      %469 = vmatpush.msra.mxu0 %v438
      %470 = vmatpush.msra.mxu0 %v430
      %471 = vmatpush.msra.mxu0 %v422
      %472 = vmatpush.msra.mxu0 %v414
      %473 = vmatpush.msra.mxu0 %v373
      %474 = vmatpush.msra.mxu0 %v406
      %475 = vmatpush.msra.mxu0 %v398
      %476 = vmatpush.msra.mxu0 %v390
      %477 = vmatpush.msra.mxu0 %v382
      %478 = vmatmul.f32.gmra.mxu0 %v440
      %v479 = vpop.f32.mrf.mxu0
      %v480 = vadd.f32 0.0, %v479
      %481 = vdwg.mxu0
      %v482 = vadd.f32 %v460, %v480
      %483 = vadd.xlane.f32.xlu0 %v482
      %v484 = vpop.xlane.xlu0 %483
      %v485 = vmul.f32 %v484, %v346
      %v486 = vmul.f32 %v460, %v460
      %v487 = vmul.f32 %v480, %v480
      %v488 = vadd.f32 %v486, %v487
      %489 = vadd.xlane.f32.xlu0 %v488
      %v490 = vpop.xlane.xlu0 %489
      %v491 = vmul.f32 %v490, %v346
      %v492 = vmul.f32 %v485, %v485
      %v493 = vsub.f32 %v491, %v492
      %v494 = vmax.f32 %v493, 0.0
      %v495 = vsub.f32 %v460, %v485
      %v496 = vsub.f32 %v480, %v485
      %v497 = vadd.f32 %v494, 1e-05
      %v498 = vrsqrt.pop %v497
      %v499 = vmul.f32 %v498, %v497
      %v500 = vmul.f32 %v499, %v498
      %v501 = vmul.f32 0.5, %v500
      %v502 = vsub.f32 1.5, %v501
      %v503 = vmul.f32 %v498, %v502
      %vm504 = vweird.f32 %v497
      %vm505 = vweird.f32 %v498
      %vm506 = vmor %vm504, %vm505
      %v507 = vsel %vm506, %v498, %v503
      %v508 = vmul.f32 %v495, %v507
      %v509 = vmul.f32 %v496, %v507
      %v510 = vmax.f32 %v508, 0.0
      %v511 = vmax.f32 %v509, 0.0
      %v512 = vadd.f32 %v510, %v198
      %v513 = vadd.f32 %v511, %v199
      %514 = vst [vmem:[%s197] sm:$0xff] %v512
      %515 = vst [vmem:[%s197 + $0x8] sm:$0xff] %v513
      %p516 = scmp.lt.s32.totalorder %s15, 1
      %s517 = scalar_select %p516, %s15, 1
      %s518 = smul.addr %s517, 2
      %s519 = smul.addr %s518, 8
      %s520 = scalar_lea.vmem %s4, %s519
      // Predicated region
      $region37: #{res_unit_pallas.1} parent=35 // pred_check
        %p521 = pneg %p122
      $region38: #{res_unit_pallas.1} parent=35 // pred_check_branch
        %523 = sbr.rel (%p521) target = $region40
      $region39: #{res_unit_pallas.1} parent=35 // pred_region
        _
      $region40: #{res_unit_pallas.1} parent=35 // pred_fallthru
        _
    $region36: #{res_unit_pallas.1} parent=5 // pred_fallthru
      _
    %p524 = scmp.le.s32.totalorder 2, %s10
    // Predicated region
    $region41: #{res_unit_pallas.1} parent=5 // pred_check
      %p525 = pneg %p524
    $region42: #{res_unit_pallas.1} parent=5 // pred_check_branch
      %527 = sbr.rel (%p525) target = $region44
    $region43: #{res_unit_pallas.1} parent=5 // pred_region
      %s528 = ssub.s32 %s10, 2
      // Predicated region
      $region45: #{res_unit_pallas.1} parent=43 // pred_check
        %p529 = pneg %p128
      $region46: #{res_unit_pallas.1} parent=43 // pred_check_branch
        %531 = sbr.rel (%p529) target = $region48
      $region47: #{res_unit_pallas.1} parent=43 // pred_region
        %p532 = scmp.lt.s32.totalorder %s16, 1
        %s533 = scalar_select %p532, %s16, 1
        %s534 = smul.addr %s533, 2
        %s535 = smul.addr %s534, 8
        %s536 = scalar_lea.vmem %s4, %s535
      $region48: #{res_unit_pallas.1} parent=43 // pred_fallthru
        _
    $region44: #{res_unit_pallas.1} parent=5 // pred_fallthru
      _
  $region6: #{res_unit_pallas.1} parent=0 // loop_footer
    %s14 = sadd.s32 1, %s10
  $region7: #{res_unit_pallas.1} parent=0 // loop_footer_branch
    %9 = sbr.rel target = $region3
  $region8: #{res_unit_pallas.1} parent=0 // loop_exit
    _

</llo_original>
